<compile_context>
chip_gen: v5e
topology: v5e:2x2
jax: 0.10.0
libtpu: 0.0.40
codegen_flags: <defaults>
</compile_context>

<pallas_src>
import functools

import jax
import jax.numpy as jnp
import numpy as np
from jax import lax
from jax.experimental import pallas as pl
from jax.experimental.pallas import tpu as pltpu

_LANES = 128
_OROW_ALIGN = 16          # bf16 sublane packing for the (O, K) weight tile
_K_ALIGN = 16             # contraction-dim (sublane) alignment for bf16 patches
_VMEM_LIMIT = 32 * 1024 * 1024   # safe on v5e/v6e (128 MiB) and v7x (64 MiB)
_TILE_BUDGET = 12 << 20          # per-step working set budget (double-buffered)


def _round_up(x, m):
    return ((x + m - 1) // m) * m


# ------------------------------ kernels --------------------------------------

def _part_block(val):
    # Scalar partial -> a (8, 128) block with the value at [0, 0], zeros elsewhere.
    sub = lax.broadcasted_iota(jnp.int32, (8, _LANES), 0)
    lane = lax.broadcasted_iota(jnp.int32, (8, _LANES), 1)
    return jnp.where((sub == 0) & (lane == 0), val, jnp.float32(0.0))


def _conv_mm_kernel(w_ref, p_ref, y_ref, ss_ref):
    # (O, K) @ (K, TILE_M) on the MXU, bf16 inputs, f32 accumulation.
    y = jnp.dot(w_ref[...], p_ref[...], preferred_element_type=jnp.float32)
    y_ref[...] = y
    # per-tile partial sum-of-squares for the (optional) two-pass L2 normalize
    ss_ref[...] = _part_block(jnp.sum(y * y))


def _conv_dot_kernel(w_ref, p_ref, u_ref, dp_ref):
    # Fused sigma path: compute the conv tile and reduce <u, Wv> without ever
    # writing the conv output to HBM.
    y = jnp.dot(w_ref[...], p_ref[...], preferred_element_type=jnp.float32)
    dp_ref[...] = _part_block(jnp.sum(u_ref[...] * y))


def _scale_kernel(part_ref, x_ref, o_ref, *, eps):
    # out = x / max(||x||, eps)  via EUP rsqrt (1/max(norm,eps) == rsqrt(max(ss,eps^2)))
    total = jnp.sum(part_ref[...])
    inv = lax.rsqrt(jnp.maximum(total, jnp.float32(eps * eps)))
    o_ref[...] = x_ref[...] * inv


def _sumsq_kernel(x_ref, part_ref):
    x = x_ref[...]
    part_ref[...] = _part_block(jnp.sum(x * x))


def _sigma_scale_kernel(dp_ref, w_ref, o_ref, *, coeff):
    sigma = jnp.sum(dp_ref[...])
    factor = jnp.maximum(jnp.float32(1.0), sigma / jnp.float32(coeff))
    o_ref[...] = w_ref[...] / (factor + jnp.float32(1e-5))


# --------------------------- pallas_call builders -----------------------------
# Builders are memoized on static shape/config so each distinct kernel is
# compiled exactly once even though the power method loops in Python.

def _mm_cost(orows, Kp, Mp):
    return pl.CostEstimate(
        flops=2 * orows * Kp * Mp,
        transcendentals=0,
        bytes_accessed=Kp * Mp * 2 + orows * Kp * 2 + orows * Mp * 4)


def _cparams():
    return pltpu.CompilerParams(dimension_semantics=("parallel",),
                                vmem_limit_bytes=_VMEM_LIMIT)


@functools.lru_cache(maxsize=None)
def _build_conv_mm(orows, Kp, Mp, tile_m, eps, normalize):
    G = Mp // tile_m
    mm = pl.pallas_call(
        _conv_mm_kernel,
        grid=(G,),
        in_specs=[pl.BlockSpec((orows, Kp), lambda i: (0, 0)),      # resident weight
                  pl.BlockSpec((Kp, tile_m), lambda i: (0, i))],    # streamed patches
        out_specs=(pl.BlockSpec((orows, tile_m), lambda i: (0, i)),
                   pl.BlockSpec((8, _LANES), lambda i: (i, 0))),
        out_shape=(jax.ShapeDtypeStruct((orows, Mp), jnp.float32),
                   jax.ShapeDtypeStruct((G * 8, _LANES), jnp.float32)),
        compiler_params=_cparams(),
        cost_estimate=_mm_cost(orows, Kp, Mp),
    )
    if normalize:
        scale = pl.pallas_call(
            functools.partial(_scale_kernel, eps=eps),
            grid=(G,),
            in_specs=[pl.BlockSpec((G * 8, _LANES), lambda i: (0, 0)),
                      pl.BlockSpec((orows, tile_m), lambda i: (0, i))],
            out_specs=pl.BlockSpec((orows, tile_m), lambda i: (0, i)),
            out_shape=jax.ShapeDtypeStruct((orows, Mp), jnp.float32),
            compiler_params=_cparams(),
        )

        def run(w_p, patches_p):
            y, ss = mm(w_p, patches_p)
            return scale(ss, y)
    else:
        def run(w_p, patches_p):
            y, _ = mm(w_p, patches_p)
            return y
    return jax.jit(run)


@functools.lru_cache(maxsize=None)
def _build_conv_dot(orows, Kp, Mp, tile_m):
    G = Mp // tile_m
    call = pl.pallas_call(
        _conv_dot_kernel,
        grid=(G,),
        in_specs=[pl.BlockSpec((orows, Kp), lambda i: (0, 0)),
                  pl.BlockSpec((Kp, tile_m), lambda i: (0, i)),
                  pl.BlockSpec((orows, tile_m), lambda i: (0, i))],
        out_specs=pl.BlockSpec((8, _LANES), lambda i: (i, 0)),
        out_shape=jax.ShapeDtypeStruct((G * 8, _LANES), jnp.float32),
        compiler_params=_cparams(),
        cost_estimate=_mm_cost(orows, Kp, Mp),
    )
    return jax.jit(call)


@functools.lru_cache(maxsize=None)
def _build_sigma_scale(P, O, Kd, coeff):
    call = pl.pallas_call(
        functools.partial(_sigma_scale_kernel, coeff=coeff),
        grid=(1,),
        in_specs=[pl.BlockSpec((P, _LANES), lambda i: (0, 0)),
                  pl.BlockSpec((O, Kd), lambda i: (0, 0))],
        out_specs=pl.BlockSpec((O, Kd), lambda i: (0, 0)),
        out_shape=jax.ShapeDtypeStruct((O, Kd), jnp.float32),
        compiler_params=pltpu.CompilerParams(
            dimension_semantics=("arbitrary",),
            vmem_limit_bytes=_VMEM_LIMIT),
    )
    return jax.jit(call)


@functools.lru_cache(maxsize=None)
def _build_normalize(Rp, tile_r, eps):
    G = Rp // tile_r
    p1 = pl.pallas_call(
        _sumsq_kernel,
        grid=(G,),
        in_specs=[pl.BlockSpec((tile_r, _LANES), lambda i: (i, 0))],
        out_specs=pl.BlockSpec((8, _LANES), lambda i: (i, 0)),
        out_shape=jax.ShapeDtypeStruct((G * 8, _LANES), jnp.float32),
        compiler_params=_cparams(),
    )
    p2 = pl.pallas_call(
        functools.partial(_scale_kernel, eps=eps),
        grid=(G,),
        in_specs=[pl.BlockSpec((G * 8, _LANES), lambda i: (0, 0)),
                  pl.BlockSpec((tile_r, _LANES), lambda i: (i, 0))],
        out_specs=pl.BlockSpec((tile_r, _LANES), lambda i: (i, 0)),
        out_shape=jax.ShapeDtypeStruct((Rp, _LANES), jnp.float32),
        compiler_params=_cparams(),
    )

    def run(xp):
        return p2(p1(xp), xp)

    return jax.jit(run)


# ------------------------------ wrappers --------------------------------------

def pallas_normalize(x_flat, eps):
    L = int(x_flat.shape[0])
    rows = _round_up(L, _LANES) // _LANES
    R = _round_up(max(rows, 1), 8)
    tile_r = min(512, R)
    Rp = _round_up(R, tile_r)
    xp = jnp.zeros((Rp * _LANES,), jnp.float32).at[:L].set(
        x_flat.astype(jnp.float32)).reshape(Rp, _LANES)
    out = _build_normalize(Rp, tile_r, float(eps))(xp)
    return out.reshape(-1)[:L]


def _choose_tile_m(M, Kp, orows):
    tile = min(512, _round_up(max(int(M), 1), _LANES))
    # double-buffered bf16 patches + f32 output/u tiles must fit the budget
    # (re-derived conservatively so it also holds on v7x's smaller VMEM).
    while tile > _LANES and (2 * Kp * tile * 2 + 4 * orows * tile * 4) > _TILE_BUDGET:
        tile -= _LANES
    return max(tile, _LANES)


def _im2col_km(xp, KH, KW, stride, OH, OW):
    # xp: padded input (N, C, Hp, Wp) -> patches (C*KH*KW, N*OH*OW)  (K-major rows)
    # TODO(synk): replace this XLA-side patch materialization (~KH*KW x HBM
    # inflation) with per-tap shifted matmuls driven by index_map offsets.
    N, C, Hp, Wp = xp.shape
    sh, sw = stride
    cols = []
    for kh in range(KH):
        for kw in range(KW):
            cols.append(xp[:, :, kh:kh + sh * OH:sh, kw:kw + sw * OW:sw])
    col = jnp.stack(cols, axis=2)                       # (N, C, KH*KW, OH, OW)
    col = col.reshape(N, C * KH * KW, OH * OW)
    col = col.transpose(1, 0, 2).reshape(C * KH * KW, N * OH * OW)
    return col


def _pad_to(a, rows, cols):
    r, c = a.shape
    if r == rows and c == cols:
        return a
    return jnp.pad(a, ((0, rows - r), (0, cols - c)))


def _prep_operands(x_nchw, w_flat, KH, KW, stride, padding_hw, OH, OW):
    """Pad + pack conv operands: returns (weight bf16 (Op,Kp), patches bf16 (Kp,Mp), M, tile_m)."""
    ph, pw = padding_hw
    xp = jnp.pad(x_nchw, ((0, 0), (0, 0), (ph, ph), (pw, pw)))
    patches = _im2col_km(xp, KH, KW, stride, OH, OW)      # (K, M) f32
    K, M = patches.shape
    O = w_flat.shape[0]
    Kp = _round_up(K, _K_ALIGN)
    orows = _round_up(O, _OROW_ALIGN)
    tile_m = _choose_tile_m(M, Kp, orows)
    Mp = _round_up(M, tile_m)
    patches_p = _pad_to(patches, Kp, Mp).astype(jnp.bfloat16)
    w_p = _pad_to(w_flat, orows, Kp).astype(jnp.bfloat16)
    return w_p, patches_p, M, tile_m


def conv2d_pallas(x, w, stride, padding, eps, normalize=False):
    # x: (N, C, H, W), w: (O, C, KH, KW) -> (N, O, OH, OW); optionally globally
    # L2-normalized (F.normalize over the flattened output).
    N, C, H, W = x.shape
    O, _, KH, KW = w.shape
    sh, sw = stride
    ph, pw = padding
    OH = (H + 2 * ph - KH) // sh + 1
    OW = (W + 2 * pw - KW) // sw + 1
    w_flat = w.reshape(O, C * KH * KW)
    w_p, patches_p, M, tile_m = _prep_operands(x, w_flat, KH, KW, (sh, sw),
                                               (ph, pw), OH, OW)
    y = _build_conv_mm(w_p.shape[0], w_p.shape[1], patches_p.shape[1],
                       tile_m, float(eps), bool(normalize))(w_p, patches_p)
    return y[:O, :M].reshape(O, N, OH, OW).transpose(1, 0, 2, 3)


def conv_transpose2d_pallas(y, w, stride, padding, output_padding, eps,
                            normalize=False):
    # y: (N, O, OH, OW), w: (O, C, KH, KW) -> (N, C, H, W)
    # conv_transpose == stride-1 conv over the dilated, zero-padded y with the
    # spatially flipped, channel-swapped kernel.
    N, O, OH, OW = y.shape
    _, C, KH, KW = w.shape
    sh, sw = stride
    ph, pw = padding
    assert KH - 1 - ph >= 0 and KW - 1 - pw >= 0  # TODO(synk): negative-crop case
    Hd = (OH - 1) * sh + 1
    Wd = (OW - 1) * sw + 1
    # TODO(synk): fold dilation/padding into the patch index_map instead of
    # materializing the ~sh*sw x larger dilated tensor in HBM.
    yd = jnp.zeros((N, O, Hd, Wd), y.dtype).at[:, :, ::sh, ::sw].set(y)
    yp = jnp.pad(yd, ((0, 0), (0, 0),
                      (KH - 1 - ph, KH - 1 - ph + output_padding),
                      (KW - 1 - pw, KW - 1 - pw + output_padding)))
    wf = w[:, :, ::-1, ::-1].transpose(1, 0, 2, 3)        # (C, O, KH, KW)
    Hout = yp.shape[2] - KH + 1
    Wout = yp.shape[3] - KW + 1
    w_flat = wf.reshape(C, O * KH * KW)
    w_p, patches_p, M, tile_m = _prep_operands(yp, w_flat, KH, KW, (1, 1),
                                               (0, 0), Hout, Wout)
    out = _build_conv_mm(w_p.shape[0], w_p.shape[1], patches_p.shape[1],
                         tile_m, float(eps), bool(normalize))(w_p, patches_p)
    return out[:C, :M].reshape(C, N, Hout, Wout).transpose(1, 0, 2, 3)


def conv2d_sigma_weight(v_flat, u_flat, w, input_dim, out_shape, stride,
                        padding, coeff):
    # Fused: sigma = <u, conv2d(v, W)>, factor = max(1, sigma/coeff),
    # return W / (factor + 1e-5).  The conv output never hits HBM.
    N, C, H, W_ = input_dim
    O, _, KH, KW = w.shape
    OH, OW = out_shape[2], out_shape[3]
    w_flat = w.reshape(O, C * KH * KW)
    w_p, patches_p, M, tile_m = _prep_operands(v_flat.reshape(input_dim),
                                               w_flat, KH, KW, stride,
                                               padding, OH, OW)
    orows, Kp = w_p.shape
    Mp = patches_p.shape[1]
    # u in the kernel's (O, N*OH*OW) output layout
    u_om = u_flat.reshape(out_shape).transpose(1, 0, 2, 3).reshape(O, M)
    u_om = _pad_to(u_om.astype(jnp.float32), orows, Mp)
    dp = _build_conv_dot(orows, Kp, Mp, tile_m)(w_p, patches_p, u_om)
    w2d = w_flat.astype(jnp.float32)
    out2d = _build_sigma_scale(dp.shape[0], w2d.shape[0], w2d.shape[1],
                               float(coeff))(dp, w2d)
    return out2d.reshape(w.shape)


# ---------------------------- module equivalent -------------------------------

class SpectralNormConvPallas:
    """JAX/Pallas port of torch _SpectralNormConv (forward pass)."""

    def __init__(self, weight, input_dim, stride, padding,
                 n_power_iterations=1, eps=1e-12, coeff=1.0, key=None):
        if n_power_iterations <= 0:
            raise ValueError("Expected n_power_iterations to be positive, got "
                             f"{n_power_iterations}")
        self.coeff = float(coeff)
        self.input_dim = tuple(int(d) for d in input_dim)
        self.stride = tuple(int(s) for s in stride)
        self.padding = tuple(int(p) for p in padding)
        self.n_power_iterations = int(n_power_iterations)
        self.eps = float(eps)
        self.dim = weight.ndim
        if key is None:
            key = jax.random.PRNGKey(0)

        if weight.ndim > 1:
            N, C, H, W = self.input_dim
            O, _, KH, KW = weight.shape
            sh, sw = self.stride
            ph, pw = self.padding
            OH = (H + 2 * ph - KH) // sh + 1
            OW = (W + 2 * pw - KW) // sw + 1
            self.out_shape = (N, O, OH, OW)
            num_in = N * C * H * W
            num_out = N * O * OH * OW
            kv, ku = jax.random.split(key)
            self._v = pallas_normalize(
                jax.random.normal(kv, (num_in,), jnp.float32), self.eps)
            self._u = pallas_normalize(
                jax.random.normal(ku, (num_out,), jnp.float32), self.eps)
            self._power_method(weight, 15)

    def _power_method(self, weight, n_iters):
        output_padding = 0
        if self.stride[0] > 1:
            output_padding = 1 - self.input_dim[-1] % 2
        u, v = self._u, self._v
        for _ in range(n_iters):
            v_s = conv_transpose2d_pallas(u.reshape(self.out_shape), weight,
                                          self.stride, self.padding,
                                          output_padding, self.eps,
                                          normalize=True)
            v = v_s.reshape(-1)                      # NCHW flatten, like .view(-1)
            u_s = conv2d_pallas(v.reshape(self.input_dim), weight,
                                self.stride, self.padding, self.eps,
                                normalize=True)
            u = u_s.reshape(-1)
        self._u, self._v = u, v

    def __call__(self, weight, training=True):
        if weight.ndim == 1:
            return pallas_normalize(weight, self.eps)
        if training:
            self._power_method(weight, self.n_power_iterations)
        return conv2d_sigma_weight(self._v, self._u, weight, self.input_dim,
                                   self.out_shape, self.stride, self.padding,
                                   self.coeff)

    def right_inverse(self, value):
        return value


# ---------------------------------- main --------------------------------------

if __name__ == "__main__":
    key = jax.random.PRNGKey(0)
    k_w, k_init = jax.random.split(key)

    O, C, KH, KW = 8, 4, 3, 3
    weight = jax.random.normal(k_w, (O, C, KH, KW), jnp.float32) * 0.1
    input_dim = (2, C, 16, 16)
    stride = (1, 1)
    padding = (1, 1)

    sn = SpectralNormConvPallas(weight, input_dim, stride, padding,
                                n_power_iterations=1, eps=1e-12, coeff=1.0,
                                key=k_init)
    out = sn(weight, training=True)
    out = jax.block_until_ready(out)

    # silent sanity check: Pallas tiled MXU conv (bf16 inputs, f32 accumulation)
    # vs XLA conv at the same precision.
    v = sn._v
    wv_pallas = conv2d_pallas(v.reshape(input_dim), weight, stride, padding,
                              sn.eps, normalize=False)
    wv_ref = lax.conv_general_dilated(
        v.reshape(input_dim).astype(jnp.bfloat16),
        weight.astype(jnp.bfloat16),
        window_strides=stride,
        padding=[(padding[0], padding[0]), (padding[1], padding[1])],
        dimension_numbers=("NCHW", "OIHW", "NCHW"),
        preferred_element_type=jnp.float32)
    np.testing.assert_allclose(np.asarray(wv_pallas), np.asarray(wv_ref),
                               rtol=1e-3, atol=1e-4)
    assert out.shape == weight.shape
    assert bool(jnp.all(jnp.isfinite(out)))

    print("KERNEL_OK")
</pallas_src>

<mosaic_0001>
module attributes {stable_mosaic.version = 11 : i64} {
  func.func @_sumsq_kernel(%arg0: i32, %arg1: memref<16x128xf32, #tpu.memory_space<vmem>>, %arg2: memref<8x128xf32, #tpu.memory_space<vmem>>) attributes {dimension_semantics = [#tpu.dimension_semantics<parallel>], iteration_bounds = array<i64: 1>, scalar_prefetch = 0 : i64, scratch_operands = 0 : i64, tpu.core_type = #tpu.core_type<tc>, window_params = [{transform_indices = @transform_0, window_bounds = array<i64: 16, 128>}, {transform_indices = @transform_1, window_bounds = array<i64: 8, 128>}]} {
    %c0 = arith.constant 0 : index
    %c0_0 = arith.constant 0 : index
    %0 = vector.load %arg1[%c0, %c0_0] : memref<16x128xf32, #tpu.memory_space<vmem>>, vector<16x128xf32>
    %1 = arith.mulf %0, %0 : vector<16x128xf32>
    %2 = vector.shape_cast %1 : vector<16x128xf32> to vector<1x16x128xf32>
    %cst = arith.constant dense<0.000000e+00> : vector<1xf32>
    %3 = vector.multi_reduction <add>, %2, %cst [1, 2] : vector<1x16x128xf32> to vector<1xf32>
    %4 = vector.shape_cast %3 : vector<1xf32> to vector<1x1x1xf32>
    %5 = vector.extract %4[0, 0, 0] : f32 from vector<1x1x1xf32>
    %6 = tpu.iota {dimensions = array<i32: 0>} : vector<8x128xi32>
    %7 = tpu.iota {dimensions = array<i32: 1>} : vector<8x128xi32>
    %c0_i32 = arith.constant 0 : i32
    %8 = vector.broadcast %c0_i32 : i32 to vector<8x128xi32>
    %9 = arith.cmpi eq, %6, %8 : vector<8x128xi32>
    %c0_i32_1 = arith.constant 0 : i32
    %10 = vector.broadcast %c0_i32_1 : i32 to vector<8x128xi32>
    %11 = arith.cmpi eq, %7, %10 : vector<8x128xi32>
    %12 = arith.andi %9, %11 : vector<8x128xi1>
    %cst_2 = arith.constant 0.000000e+00 : f32
    %13 = vector.broadcast %5 : f32 to vector<8x128xf32>
    %14 = vector.broadcast %cst_2 : f32 to vector<8x128xf32>
    %15 = arith.select %12, %13, %14 : vector<8x128xi1>, vector<8x128xf32>
    %c0_3 = arith.constant 0 : index
    %c0_4 = arith.constant 0 : index
    %16 = vector.load %arg2[%c0_3, %c0_4] : memref<8x128xf32, #tpu.memory_space<vmem>>, vector<8x128xf32>
    tpu.vector_store %arg2[%c0_3, %c0_4], %15 {strides = array<i32>} : memref<8x128xf32, #tpu.memory_space<vmem>>, vector<8x128xf32>,
    return
  }
  func.func @transform_0(%arg0: i32) -> (i32, i32) {
    %c0_i32 = arith.constant 0 : i32
    %c0_i32_0 = arith.constant 0 : i32
    return %arg0, %c0_i32 : i32, i32
  }
  func.func @transform_1(%arg0: i32) -> (i32, i32) {
    %c0_i32 = arith.constant 0 : i32
    %c0_i32_0 = arith.constant 0 : i32
    return %arg0, %c0_i32 : i32, i32
  }
}

module attributes {stable_mosaic.version = 11 : i64} {
  func.func @_scale_kernel(%arg0: i32, %arg1: memref<8x128xf32, #tpu.memory_space<vmem>>, %arg2: memref<16x128xf32, #tpu.memory_space<vmem>>, %arg3: memref<16x128xf32, #tpu.memory_space<vmem>>) attributes {dimension_semantics = [#tpu.dimension_semantics<parallel>], iteration_bounds = array<i64: 1>, scalar_prefetch = 0 : i64, scratch_operands = 0 : i64, tpu.core_type = #tpu.core_type<tc>, window_params = [{pipeline_mode = #tpu.pipeline_mode<synchronous>, transform_indices = @transform_0, window_bounds = array<i64: 8, 128>}, {transform_indices = @transform_1, window_bounds = array<i64: 16, 128>}, {transform_indices = @transform_2, window_bounds = array<i64: 16, 128>}]} {
    %c0 = arith.constant 0 : index
    %c0_0 = arith.constant 0 : index
    %0 = vector.load %arg1[%c0, %c0_0] : memref<8x128xf32, #tpu.memory_space<vmem>>, vector<8x128xf32>
    %1 = vector.shape_cast %0 : vector<8x128xf32> to vector<1x8x128xf32>
    %cst = arith.constant dense<0.000000e+00> : vector<1xf32>
    %2 = vector.multi_reduction <add>, %1, %cst [1, 2] : vector<1x8x128xf32> to vector<1xf32>
    %3 = vector.shape_cast %2 : vector<1xf32> to vector<1x1x1xf32>
    %4 = vector.extract %3[0, 0, 0] : f32 from vector<1x1x1xf32>
    %cst_1 = arith.constant 1.000000e-24 : f32
    %5 = arith.maximumf %4, %cst_1 : f32
    %6 = math.rsqrt %5 : f32
    %c0_2 = arith.constant 0 : index
    %c0_3 = arith.constant 0 : index
    %7 = vector.load %arg2[%c0_2, %c0_3] : memref<16x128xf32, #tpu.memory_space<vmem>>, vector<16x128xf32>
    %8 = vector.broadcast %6 : f32 to vector<16x128xf32>
    %9 = arith.mulf %7, %8 : vector<16x128xf32>
    %c0_4 = arith.constant 0 : index
    %c0_5 = arith.constant 0 : index
    %10 = vector.load %arg3[%c0_4, %c0_5] : memref<16x128xf32, #tpu.memory_space<vmem>>, vector<16x128xf32>
    tpu.vector_store %arg3[%c0_4, %c0_5], %9 {strides = array<i32>} : memref<16x128xf32, #tpu.memory_space<vmem>>, vector<16x128xf32>,
    return
  }
  func.func @transform_0(%arg0: i32) -> (i32, i32) {
    %c0_i32 = arith.constant 0 : i32
    %c0_i32_0 = arith.constant 0 : i32
    %c0_i32_1 = arith.constant 0 : i32
    return %c0_i32, %c0_i32_0 : i32, i32
  }
  func.func @transform_1(%arg0: i32) -> (i32, i32) {
    %c0_i32 = arith.constant 0 : i32
    %c0_i32_0 = arith.constant 0 : i32
    return %arg0, %c0_i32 : i32, i32
  }
  func.func @transform_2(%arg0: i32) -> (i32, i32) {
    %c0_i32 = arith.constant 0 : i32
    %c0_i32_0 = arith.constant 0 : i32
    return %arg0, %c0_i32 : i32, i32
  }
}

</mosaic_0001>

<llo_original>
// kernel: run.3
$region0: #{run.3}
  #allocation0 [shape = 'u32[]', space=smem, size = 0x4, offset = 0x4, fixed_abs, tag = 'smem constant byte address 0x4 - core index']
  #allocation1 [shape = 'u32[72,128]{1,0:T(1,128)}', space=vmem, size = 0x9000, scoped, tag = 'internal scratch']
  %s0 = inlined_call_operand.vmem [shape: f32[8,128], index: 0, kind: input, shape index: {}]
  %s1 = inlined_call_operand.hbm [shape: f32[16,128], index: 1, kind: input, shape index: {}]
  %s2 = inlined_call_operand.hbm [shape: f32[16,128], index: 2, kind: output, shape index: {}]
  %s3 = sld [smem:[#allocation0]]
  $region22: #{run.3} parent=0
    _
  %s5 = ssub.s32 1, %s3
  %s6 = scalar_select 0, %s5, %s3
  $region1: #{run.3} parent=0
    #allocation2 [shape = 'u8[8192]{0}', space=vmem, size = 0x2000, scoped, tag = 'input window, operand 1, single buffered']
    #allocation3 [shape = 's32[1]{0}', space=sflag, size = 0x4, scoped, tag = 'scoped memory for run.3']
    #allocation4 [shape = 's32[1]{0}', space=sflag, size = 0x4, scoped, tag = 'scoped memory for run.3']
    #allocation5 [shape = 'u8[8192]{0}', space=vmem, size = 0x2000, scoped, tag = 'output window, operand 0, single buffered']
    %7 = vsyncpa [#allocation3], 0
    %8 = vsyncpa [#allocation4], 0
    // Predicated region
    $region2: #{run.3} parent=1 // pred_check
      _
    $region3: #{run.3} parent=1 // pred_check_branch
      %10 = sbr.rel (0) target = $region5
    $region4: #{run.3} parent=1 // pred_region
      _
    $region5: #{run.3} parent=1 // pred_fallthru
      _
    // Predicated region
    $region6: #{run.3} parent=1 // pred_check
      _
    $region7: #{run.3} parent=1 // pred_check_branch
      %12 = sbr.rel (0) target = $region9
    $region8: #{run.3} parent=1 // pred_region
      %14 = vsyncadd [#allocation3], 0
      %s15 = sshll.u32 %s1, 4
      %s16 = int_to_ptr.hbm [resolvable:$true] %s15
      %s17 = sshll.u32 [#allocation2], 4
      %s18 = int_to_ptr.vmem [resolvable:$true] %s17
      %23 = dma.hbm_to_vmem [thread:$0]  %s16, 256, %s18, [#allocation3], 128, 128, 8
    $region9: #{run.3} parent=1 // pred_fallthru
      _
    // Predicated region
    $region10: #{run.3} parent=1 // pred_check
      _
    $region11: #{run.3} parent=1 // pred_check_branch
      %25 = sbr.rel (0) target = $region13
    $region12: #{run.3} parent=1 // pred_region
      %27 = dma.done [#allocation3], 256
    $region13: #{run.3} parent=1 // pred_fallthru
      _
    %v28 = vld [vmem:[%s0] sm:$0xff]
    %29 = vadd.xlane.f32.xlu0 %v28
    %v30 = vpop.xlane.xlu0 %29
    %v31 = vrot.slane %v30, 4
    %v32 = vadd.f32 %v30, %v31
    %v33 = vrot.slane %v32, 2
    %v34 = vadd.f32 %v32, %v33
    %v35 = vrot.slane %v34, 1
    %v36 = vadd.f32 %v34, %v35
    %s37 = vtos %v36
    %s38 = smax.f32 %s37, 1e-24
    %v39 = vstv %s38
    %v40 = vrsqrt.pop %v39
    %v41 = vmul.f32 %v40, %v39
    %v42 = vmul.f32 %v41, %v40
    %v43 = vmul.f32 0.5, %v42
    %v44 = vsub.f32 1.5, %v43
    %v45 = vmul.f32 %v40, %v44
    %vm46 = vweird.f32 %v39
    %vm47 = vweird.f32 %v40
    %vm48 = vmor %vm46, %vm47
    %v49 = vsel %vm48, %v40, %v45
    %s50 = vtos %v49
    %v51 = vld [vmem:[#allocation2] sm:$0xff]
    %v52 = vld [vmem:[#allocation2 + $0x8] sm:$0xff]
    %v53 = vstv %s50
    %v54 = vmul.f32 %v51, %v53
    %v55 = vmul.f32 %v52, %v53
    %56 = vst [vmem:[#allocation5] sm:$0xff] %v54
    %57 = vst [vmem:[#allocation5 + $0x8] sm:$0xff] %v55
    // Predicated region
    $region14: #{run.3} parent=1 // pred_check
      _
    $region15: #{run.3} parent=1 // pred_check_branch
      %59 = sbr.rel (0) target = $region17
    $region16: #{run.3} parent=1 // pred_region
      %61 = vsyncadd [#allocation4], 0
      %s62 = sshll.u32 [#allocation5], 4
      %s63 = int_to_ptr.vmem [resolvable:$true] %s62
      %s64 = sshll.u32 %s2, 4
      %s65 = int_to_ptr.hbm [resolvable:$true] %s64
      %70 = dma.vmem_to_hbm [thread:$0]  %s63, 256, %s65, [#allocation4], 128, 128, 8
    $region17: #{run.3} parent=1 // pred_fallthru
      _
    // Predicated region
    $region18: #{run.3} parent=1 // pred_check
      _
    $region19: #{run.3} parent=1 // pred_check_branch
      %72 = sbr.rel (0) target = $region21
    $region20: #{run.3} parent=1 // pred_region
      %74 = dma.done [#allocation4], 256
    $region21: #{run.3} parent=1 // pred_fallthru
      _
    %75 = vsyncpa [#allocation3], 1
    %76 = vsyncpa [#allocation4], 1

// kernel: run.2
$region0: #{run.2}
  #allocation0 [shape = 'u32[]', space=smem, size = 0x4, offset = 0x4, fixed_abs, tag = 'smem constant byte address 0x4 - core index']
  #allocation1 [shape = 'u32[72,128]{1,0:T(1,128)}', space=vmem, size = 0x9000, scoped, tag = 'internal scratch']
  %s0 = inlined_call_operand.hbm [shape: f32[16,128], index: 0, kind: input, shape index: {}]
  %s1 = inlined_call_operand.vmem [shape: f32[8,128], index: 1, kind: output, shape index: {}]
  %s2 = sld [smem:[#allocation0]]
  $region18: #{run.2} parent=0
    _
  %s4 = ssub.s32 1, %s2
  %s5 = scalar_select 0, %s4, %s2
  $region1: #{run.2} parent=0
    #allocation2 [shape = 'u8[8192]{0}', space=vmem, size = 0x2000, scoped, tag = 'input window, operand 0, single buffered']
    #allocation3 [shape = 's32[1]{0}', space=sflag, size = 0x4, scoped, tag = 'scoped memory for run.2']
    %6 = vsyncpa [#allocation3], 0
    // Predicated region
    $region2: #{run.2} parent=1 // pred_check
      _
    $region3: #{run.2} parent=1 // pred_check_branch
      %8 = sbr.rel (0) target = $region5
    $region4: #{run.2} parent=1 // pred_region
      %10 = vsyncadd [#allocation3], 0
      %s11 = sshll.u32 %s0, 4
      %s12 = int_to_ptr.hbm [resolvable:$true] %s11
      %s13 = sshll.u32 [#allocation2], 4
      %s14 = int_to_ptr.vmem [resolvable:$true] %s13
      %19 = dma.hbm_to_vmem [thread:$0]  %s12, 256, %s14, [#allocation3], 128, 128, 8
    $region5: #{run.2} parent=1 // pred_fallthru
      _
    // Predicated region
    $region6: #{run.2} parent=1 // pred_check
      _
    $region7: #{run.2} parent=1 // pred_check_branch
      %21 = sbr.rel (0) target = $region9
    $region8: #{run.2} parent=1 // pred_region
      %23 = dma.done [#allocation3], 256
    $region9: #{run.2} parent=1 // pred_fallthru
      _
    %v24 = vld [vmem:[#allocation2] sm:$0xff]
    %v25 = vld [vmem:[#allocation2 + $0x8] sm:$0xff]
    %v26 = vmul.f32 %v24, %v24
    %v27 = vmul.f32 %v25, %v25
    %v28 = vadd.f32 %v26, %v27
    %29 = vadd.xlane.f32.xlu0 %v28
    %v30 = vpop.xlane.xlu0 %29
    %v31 = vrot.slane %v30, 4
    %v32 = vadd.f32 %v30, %v31
    %v33 = vrot.slane %v32, 2
    %v34 = vadd.f32 %v32, %v33
    %v35 = vrot.slane %v34, 1
    %v36 = vadd.f32 %v34, %v35
    %s37 = vtos %v36
    %v38 = vlaneseq
    %v39 = vshrl.u32 %v38, 7
    %v40 = vlaneseq
    %v41 = vand.u32 %v40, 127
    %vm42 = vcmp.eq.s32.totalorder %v39, 0
    %vm43 = vcmp.eq.s32.totalorder %v41, 0
    %vm44 = vmand %vm42, %vm43
    %v45 = vstv %s37
    %v46 = vsel %vm44, %v45, 0.0
    %47 = vst [vmem:[%s1] sm:$0xff] %v46
    // Predicated region
    $region10: #{run.2} parent=1 // pred_check
      _
    $region11: #{run.2} parent=1 // pred_check_branch
      %49 = sbr.rel (0) target = $region13
    $region12: #{run.2} parent=1 // pred_region
      _
    $region13: #{run.2} parent=1 // pred_fallthru
      _
    // Predicated region
    $region14: #{run.2} parent=1 // pred_check
      _
    $region15: #{run.2} parent=1 // pred_check_branch
      %51 = sbr.rel (0) target = $region17
    $region16: #{run.2} parent=1 // pred_region
      _
    $region17: #{run.2} parent=1 // pred_fallthru
      _
    %52 = vsyncpa [#allocation3], 1

</llo_original>
